<compile_context>
chip_gen: v6e
topology: v6e:2x2x1
jax: 0.10.0
libtpu: 0.0.40
codegen_flags: <defaults>
</compile_context>

<pallas_src>
import jax
import jax.numpy as jnp
from jax.experimental import pallas as pl
from jax.experimental.pallas import tpu as pltpu


def _round_up(x, m):
    return ((x + m - 1) // m) * m


# ----------------------------- 2PL kernel -----------------------------------
def _twopl_kernel(theta_ref, aT_ref, b_ref, o_ref):
    theta = theta_ref[...]            # (tm, D)
    aT = aT_ref[...]                  # (D, tn)  lane-dense in items, no in-kernel .T
    b = b_ref[...]                    # (1, tn)
    logits = jnp.dot(theta, aT, preferred_element_type=jnp.float32) - b
    # sigmoid(x) = 0.5 * (1 + tanh(x/2)): a single EUP push per element, exact.
    o_ref[...] = (0.5 * (1.0 + jnp.tanh(0.5 * logits))).astype(o_ref.dtype)


def twopl_forward(theta, a, b, *, tm=512, tn=1024, out_dtype=jnp.float32):
    """p = sigmoid(theta @ a.T - b), tiled over (students, items)."""
    S, D = theta.shape
    J = a.shape[0]

    # Pad only to the (8, 128) layout quantum; boundary tiles are Pallas-masked
    # partial blocks instead of inflating HBM traffic with tile-sized padding.
    Sp = _round_up(S, 8)
    Jp = _round_up(J, 128)
    tm = min(tm, Sp)
    tn = min(tn, Jp)

    theta_p = jnp.pad(theta.astype(jnp.float32), ((0, Sp - S), (0, 0)))          # (Sp, D)
    aT_p = jnp.pad(a.astype(jnp.float32).T, ((0, 0), (0, Jp - J)))                # (D, Jp)
    b_p = jnp.pad(b.astype(jnp.float32).reshape(1, J), ((0, 0), (0, Jp - J)))     # (1, Jp)

    out_bytes = jnp.dtype(out_dtype).itemsize
    cost = pl.CostEstimate(
        flops=2 * Sp * D * Jp + 4 * Sp * Jp,
        transcendentals=Sp * Jp,
        bytes_accessed=4 * (Sp * D + D * Jp + Jp) + out_bytes * Sp * Jp,
    )

    out = pl.pallas_call(
        _twopl_kernel,
        out_shape=jax.ShapeDtypeStruct((Sp, Jp), out_dtype),
        grid_spec=pltpu.PrefetchScalarGridSpec(
            num_scalar_prefetch=0,
            grid=(pl.cdiv(Sp, tm), pl.cdiv(Jp, tn)),
            in_specs=[
                pl.BlockSpec((tm, D), lambda i, j: (i, 0)),
                pl.BlockSpec((D, tn), lambda i, j: (0, j)),
                pl.BlockSpec((1, tn), lambda i, j: (0, j)),
            ],
            out_specs=pl.BlockSpec((tm, tn), lambda i, j: (i, j)),
        ),
        compiler_params=pltpu.CompilerParams(
            dimension_semantics=("parallel", "parallel"),
            vmem_limit_bytes=32 * 1024 * 1024,
        ),
        cost_estimate=cost,
    )(theta_p, aT_p, b_p)
    return out[:S, :J]


# ----------------------------- GPCM kernel ----------------------------------
def _gpcm_kernel(theta_ref, aT_ref, thr_ref, o_ref):
    theta = theta_ref[...]            # (tm, D)
    aT = aT_ref[...]                  # (D, tn)
    thr = thr_ref[...]                # (C, tn)  items on the lane axis
    C = thr_ref.shape[0]
    score = jnp.dot(theta, aT, preferred_element_type=jnp.float32)   # (tm, tn)

    # Pass 1: running max over categories; only `score`, `m` and one temp are
    # live at a time (s_c = c*score - thr[c] is recomputed, cheap VPU work).
    m = jnp.broadcast_to(-thr[0:1, :], score.shape)
    for c in range(1, C):
        m = jnp.maximum(m, float(c) * score - thr[c:c + 1, :])

    # Pass 2: stream exp(s_c - m) straight into the output block (lane-dense,
    # unmasked stores) while accumulating the denominator in f32.
    denom = jnp.zeros_like(score)
    for c in range(C):
        e = jnp.exp(float(c) * score - thr[c:c + 1, :] - m)
        denom = denom + e
        o_ref[c, :, :] = e.astype(o_ref.dtype)

    # Pass 3: in-place rescale by the exact reciprocal (HBM-bound kernel, so
    # the divide is hidden; category probabilities sum to 1 at f32 accuracy).
    inv = pl.reciprocal(denom, approx=False)
    for c in range(C):
        o_ref[c, :, :] = (o_ref[c, :, :].astype(jnp.float32) * inv).astype(o_ref.dtype)


def gpcm_forward(theta, a, b, *, tm=512, tn=512, out_dtype=jnp.float32,
                 layout="SJC"):
    """p[s,j,c] = softmax_c(c * (theta @ a.T)[s,j] - threshold[j,c])."""
    S, D = theta.shape
    J = a.shape[0]
    C = b.shape[1] + 1

    # threshold = concat([zeros(J,1), cumsum(b, axis=1)], axis=1)  (param glue)
    thr = jnp.concatenate(
        [jnp.zeros((J, 1), dtype=jnp.float32),
         jnp.cumsum(b.astype(jnp.float32), axis=1)], axis=1)                      # (J, C)

    Sp = _round_up(S, 8)
    Jp = _round_up(J, 128)
    tm = min(tm, Sp)
    tn = min(tn, Jp)

    theta_p = jnp.pad(theta.astype(jnp.float32), ((0, Sp - S), (0, 0)))           # (Sp, D)
    aT_p = jnp.pad(a.astype(jnp.float32).T, ((0, 0), (0, Jp - J)))                # (D, Jp)
    thrT_p = jnp.pad(thr.T, ((0, 0), (0, Jp - J)))                                # (C, Jp)

    out_bytes = jnp.dtype(out_dtype).itemsize
    cost = pl.CostEstimate(
        flops=2 * Sp * D * Jp + 8 * C * Sp * Jp,
        transcendentals=(C + 1) * Sp * Jp,
        bytes_accessed=4 * (Sp * D + D * Jp + C * Jp) + out_bytes * C * Sp * Jp,
    )

    out = pl.pallas_call(
        _gpcm_kernel,
        out_shape=jax.ShapeDtypeStruct((C, Sp, Jp), out_dtype),
        grid_spec=pltpu.PrefetchScalarGridSpec(
            num_scalar_prefetch=0,
            grid=(pl.cdiv(Sp, tm), pl.cdiv(Jp, tn)),
            in_specs=[
                pl.BlockSpec((tm, D), lambda i, j: (i, 0)),
                pl.BlockSpec((D, tn), lambda i, j: (0, j)),
                pl.BlockSpec((C, tn), lambda i, j: (0, j)),
            ],
            out_specs=pl.BlockSpec((C, tm, tn), lambda i, j: (0, i, j)),
        ),
        compiler_params=pltpu.CompilerParams(
            dimension_semantics=("parallel", "parallel"),
            vmem_limit_bytes=32 * 1024 * 1024,
        ),
        cost_estimate=cost,
    )(theta_p, aT_p, thrT_p)

    out = out[:, :S, :J]                       # (C, S, J), lane-dense kernel layout
    if layout == "CSJ":
        return out                             # no wrapper transpose (preferred)
    # PyTorch layout (S, J, C) — a full HBM round-trip; prefer layout="CSJ" for
    # consumers that can take category-major output.
    return jnp.transpose(out, (1, 2, 0))


# ----------------------------- reference (pure JAX) --------------------------
def twopl_ref(theta, a, b):
    return jax.nn.sigmoid(theta @ a.T - b[None, :])


def gpcm_ref(theta, a, b):
    J = a.shape[0]
    C = b.shape[1] + 1
    score = theta @ a.T
    thr = jnp.concatenate(
        [jnp.zeros((J, 1), dtype=b.dtype), jnp.cumsum(b, axis=1)], axis=1)
    c = jnp.arange(C, dtype=score.dtype)
    s = c[None, None, :] * score[:, :, None] - thr[None, :, :]
    return jax.nn.softmax(s, axis=-1)


# ----------------------------------------------------------------------------
if __name__ == "__main__":
    # MIRT(n_students, n_items, n_dims, n_categories) — small deterministic case.
    n_students, n_items, n_dims, n_categories = 8, 16, 8, 4

    key = jax.random.PRNGKey(0)
    k_theta, k_a, k_b2, k_a2, k_bg = jax.random.split(key, 5)

    # nn.Parameter(torch.randn(n_students, n_dims))
    theta = jax.random.normal(k_theta, (n_students, n_dims), dtype=jnp.float32)

    # TwoPLModel params (ones/zeros init + deterministic perturbation so the
    # test exercises non-trivial values).
    a_2pl = jnp.ones((n_items, n_dims), jnp.float32) + \
        0.1 * jax.random.normal(k_a, (n_items, n_dims), dtype=jnp.float32)
    b_2pl = 0.5 * jax.random.normal(k_b2, (n_items,), dtype=jnp.float32)

    # GPCMModel params.
    a_gpcm = jnp.ones((n_items, n_dims), jnp.float32) + \
        0.1 * jax.random.normal(k_a2, (n_items, n_dims), dtype=jnp.float32)
    b_gpcm = 0.5 * jax.random.normal(k_bg, (n_items, n_categories - 1), dtype=jnp.float32)

    # 2PL (default model in specify_model)
    p_2pl = jax.block_until_ready(twopl_forward(theta, a_2pl, b_2pl))
    ref_2pl = twopl_ref(theta, a_2pl, b_2pl)
    assert p_2pl.shape == (n_students, n_items)
    assert jnp.allclose(p_2pl, ref_2pl, atol=1e-3, rtol=1e-3)

    # GPCM
    p_gpcm = jax.block_until_ready(gpcm_forward(theta, a_gpcm, b_gpcm))
    ref_gpcm = gpcm_ref(theta, a_gpcm, b_gpcm)
    assert p_gpcm.shape == (n_students, n_items, n_categories)
    assert jnp.allclose(p_gpcm, ref_gpcm, atol=1e-3, rtol=1e-3)
    # category probabilities sum to 1
    assert jnp.allclose(jnp.sum(p_gpcm, axis=-1), 1.0, atol=1e-3)

    # Odd (non-tile-multiple) shapes to exercise the minimal (8,128)-quantum
    # padding and Pallas-masked boundary tiles.
    S2, J2 = 200, 300
    theta2 = jax.random.normal(jax.random.PRNGKey(1), (S2, n_dims), jnp.float32)
    a2 = jnp.ones((J2, n_dims), jnp.float32) + \
        0.1 * jax.random.normal(jax.random.PRNGKey(2), (J2, n_dims), jnp.float32)
    b2 = 0.5 * jax.random.normal(jax.random.PRNGKey(3), (J2,), jnp.float32)
    bg2 = 0.5 * jax.random.normal(jax.random.PRNGKey(4), (J2, n_categories - 1), jnp.float32)

    p2 = jax.block_until_ready(twopl_forward(theta2, a2, b2))
    assert p2.shape == (S2, J2)
    assert jnp.allclose(p2, twopl_ref(theta2, a2, b2), atol=1e-3, rtol=1e-3)

    pg2 = jax.block_until_ready(gpcm_forward(theta2, a2, bg2))
    assert pg2.shape == (S2, J2, n_categories)
    assert jnp.allclose(pg2, gpcm_ref(theta2, a2, bg2), atol=1e-3, rtol=1e-3)
    assert jnp.allclose(jnp.sum(pg2, axis=-1), 1.0, atol=1e-3)

    print("KERNEL_OK")
</pallas_src>

<mosaic_0001>
module attributes {stable_mosaic.version = 11 : i64} {
  func.func @_twopl_kernel(%arg0: i32, %arg1: i32, %arg2: memref<8x8xf32, #tpu.memory_space<vmem>>, %arg3: memref<8x128xf32, #tpu.memory_space<vmem>>, %arg4: memref<1x128xf32, #tpu.memory_space<vmem>>, %arg5: memref<8x128xf32, #tpu.memory_space<vmem>>) attributes {dimension_semantics = [#tpu.dimension_semantics<parallel>, #tpu.dimension_semantics<parallel>], iteration_bounds = array<i64: 1, 1>, scalar_prefetch = 0 : i64, scratch_operands = 0 : i64, tpu.core_type = #tpu.core_type<tc>, window_params = [{transform_indices = @transform_0, window_bounds = array<i64: 8, 8>}, {transform_indices = @transform_1, window_bounds = array<i64: 8, 128>}, {transform_indices = @transform_2, window_bounds = array<i64: 1, 128>}, {transform_indices = @transform_3, window_bounds = array<i64: 8, 128>}]} {
    %c0 = arith.constant 0 : index
    %c0_0 = arith.constant 0 : index
    %0 = vector.load %arg2[%c0, %c0_0] : memref<8x8xf32, #tpu.memory_space<vmem>>, vector<8x8xf32>
    %c0_1 = arith.constant 0 : index
    %c0_2 = arith.constant 0 : index
    %1 = vector.load %arg3[%c0_1, %c0_2] : memref<8x128xf32, #tpu.memory_space<vmem>>, vector<8x128xf32>
    %c0_3 = arith.constant 0 : index
    %c0_4 = arith.constant 0 : index
    %2 = vector.load %arg4[%c0_3, %c0_4] : memref<1x128xf32, #tpu.memory_space<vmem>>, vector<1x128xf32>
    %cst = arith.constant dense<0.000000e+00> : vector<8x128xf32>
    %3 = tpu.matmul %0, %1, %cst {dimension_numbers = #tpu.dot_dimension_numbers<[1], [0], [0], [1], [0, 0, 1, 1], [], []>} : vector<8x8xf32>, vector<8x128xf32>, vector<8x128xf32> -> vector<8x128xf32>
    %4 = vector.broadcast %2 : vector<1x128xf32> to vector<8x128xf32>
    %5 = arith.subf %3, %4 : vector<8x128xf32>
    %cst_5 = arith.constant 5.000000e-01 : f32
    %6 = vector.broadcast %cst_5 : f32 to vector<8x128xf32>
    %7 = arith.mulf %6, %5 : vector<8x128xf32>
    %8 = math.tanh %7 : vector<8x128xf32>
    %cst_6 = arith.constant 1.000000e+00 : f32
    %9 = vector.broadcast %cst_6 : f32 to vector<8x128xf32>
    %10 = arith.addf %9, %8 : vector<8x128xf32>
    %cst_7 = arith.constant 5.000000e-01 : f32
    %11 = vector.broadcast %cst_7 : f32 to vector<8x128xf32>
    %12 = arith.mulf %11, %10 : vector<8x128xf32>
    %c0_8 = arith.constant 0 : index
    %c0_9 = arith.constant 0 : index
    %13 = vector.load %arg5[%c0_8, %c0_9] : memref<8x128xf32, #tpu.memory_space<vmem>>, vector<8x128xf32>
    tpu.vector_store %arg5[%c0_8, %c0_9], %12 {strides = array<i32>} : memref<8x128xf32, #tpu.memory_space<vmem>>, vector<8x128xf32>,
    return
  }
  func.func @transform_0(%arg0: i32, %arg1: i32) -> (i32, i32) {
    %c0_i32 = arith.constant 0 : i32
    %c0_i32_0 = arith.constant 0 : i32
    return %arg0, %c0_i32 : i32, i32
  }
  func.func @transform_1(%arg0: i32, %arg1: i32) -> (i32, i32) {
    %c0_i32 = arith.constant 0 : i32
    %c0_i32_0 = arith.constant 0 : i32
    return %c0_i32, %arg1 : i32, i32
  }
  func.func @transform_2(%arg0: i32, %arg1: i32) -> (i32, i32) {
    %c0_i32 = arith.constant 0 : i32
    %c0_i32_0 = arith.constant 0 : i32
    return %c0_i32, %arg1 : i32, i32
  }
  func.func @transform_3(%arg0: i32, %arg1: i32) -> (i32, i32) {
    %c0_i32 = arith.constant 0 : i32
    return %arg0, %arg1 : i32, i32
  }
}

</mosaic_0001>

<llo_original>
// kernel: tpu_custom_call.1
$region0: #{tpu_custom_call.1}
  #allocation0 [shape = 'u32[]', space=smem, size = 0x4, offset = 0x4, fixed_abs, tag = 'smem constant byte address 0x4 - core index']
  #allocation1 [shape = 'u32[144,128]{1,0:T(1,128)}', space=vmem, size = 0x12000, scoped, tag = 'internal scratch']
  %s0 = inlined_call_operand.hbm [shape: f32[8,8], index: 0, kind: input, shape index: {}]
  %s1 = inlined_call_operand.hbm [shape: f32[8,128], index: 1, kind: input, shape index: {}]
  %s2 = inlined_call_operand.vmem [shape: f32[1,128], index: 2, kind: input, shape index: {}]
  %s3 = inlined_call_operand.hbm [shape: f32[8,128], index: 3, kind: output, shape index: {}]
  %s4 = sld [smem:[#allocation0]]
  $region30: #{tpu_custom_call.1} parent=0
    _
  %s6 = ssub.s32 1, %s4
  %s7 = scalar_select 0, %s6, %s4
  $region1: #{tpu_custom_call.1} parent=0
    #allocation2 [shape = 'u8[4096]{0}', space=vmem, size = 0x1000, scoped, tag = 'input window, operand 0, single buffered']
    #allocation3 [shape = 's32[1]{0}', space=sflag, size = 0x4, scoped, tag = 'scoped memory for tpu_custom_call.1']
    #allocation4 [shape = 's32[1]{0}', space=sflag, size = 0x4, scoped, tag = 'scoped memory for tpu_custom_call.1']
    #allocation5 [shape = 'u8[4096]{0}', space=vmem, size = 0x1000, scoped, tag = 'input window, operand 1, single buffered']
    #allocation6 [shape = 's32[1]{0}', space=sflag, size = 0x4, scoped, tag = 'scoped memory for tpu_custom_call.1']
    #allocation7 [shape = 'u8[4096]{0}', space=vmem, size = 0x1000, scoped, tag = 'output window, operand 0, single buffered']
    %8 = vsyncpa [#allocation3], 0
    %9 = vsyncpa [#allocation6], 0
    %10 = vsyncpa [#allocation4], 0
    // Predicated region
    $region2: #{tpu_custom_call.1} parent=1 // pred_check
      _
    $region3: #{tpu_custom_call.1} parent=1 // pred_check_branch
      %12 = sbr.rel (0) target = $region5
    $region4: #{tpu_custom_call.1} parent=1 // pred_region
      %s14 = ssub.s32 128, 128
      %15 = vsyncadd [#allocation3], %s14
      %s17 = sshll.u32 [#allocation2], 4
      %s18 = int_to_ptr.vmem [resolvable:$true] %s17
      %20 = dma.hbm_to_vmem [thread:$0]  %s0, 128, %s18, [#allocation3]
    $region5: #{tpu_custom_call.1} parent=1 // pred_fallthru
      _
    // Predicated region
    $region6: #{tpu_custom_call.1} parent=1 // pred_check
      _
    $region7: #{tpu_custom_call.1} parent=1 // pred_check_branch
      %22 = sbr.rel (0) target = $region9
    $region8: #{tpu_custom_call.1} parent=1 // pred_region
      %s24 = ssub.s32 128, 128
      %25 = vsyncadd [#allocation6], %s24
      %s27 = sshll.u32 [#allocation5], 4
      %s28 = int_to_ptr.vmem [resolvable:$true] %s27
      %30 = dma.hbm_to_vmem [thread:$0]  %s1, 128, %s28, [#allocation6]
    $region9: #{tpu_custom_call.1} parent=1 // pred_fallthru
      _
    // Predicated region
    $region10: #{tpu_custom_call.1} parent=1 // pred_check
      _
    $region11: #{tpu_custom_call.1} parent=1 // pred_check_branch
      %32 = sbr.rel (0) target = $region13
    $region12: #{tpu_custom_call.1} parent=1 // pred_region
      _
    $region13: #{tpu_custom_call.1} parent=1 // pred_fallthru
      _
    // Predicated region
    $region14: #{tpu_custom_call.1} parent=1 // pred_check
      _
    $region15: #{tpu_custom_call.1} parent=1 // pred_check_branch
      %34 = sbr.rel (0) target = $region17
    $region16: #{tpu_custom_call.1} parent=1 // pred_region
      %35 = dma.done [#allocation3], 128
    $region17: #{tpu_custom_call.1} parent=1 // pred_fallthru
      _
    // Predicated region
    $region18: #{tpu_custom_call.1} parent=1 // pred_check
      _
    $region19: #{tpu_custom_call.1} parent=1 // pred_check_branch
      %37 = sbr.rel (0) target = $region21
    $region20: #{tpu_custom_call.1} parent=1 // pred_region
      %38 = dma.done [#allocation6], 128
    $region21: #{tpu_custom_call.1} parent=1 // pred_fallthru
      _
    %v39 = vld [vmem:[#allocation2] sm:$0xff]
    %v40 = vld [vmem:[#allocation5] sm:$0xff]
    %v41 = vld [vmem:[%s2] sm:$0x1]
    %vm42 = vcmask 64512
    %v44 = vsel %vm42, %v39, 0
    %46 = vmatprep.subr.mxu0 0.0
    %47 = vmatpush1.msra.mxu0 0.0
    %48 = vmatprep.subr.mxu0 0.0
    %49 = vmatpush1.msra.mxu0 0.0
    %50 = vmatprep.subr.mxu0 0.0
    %51 = vmatpush1.msra.mxu0 0.0
    %52 = vmatprep.subr.mxu0 0.0
    %53 = vmatpush1.msra.mxu0 0.0
    %54 = vmatprep.subr.mxu0 0.0
    %55 = vmatpush1.msra.mxu0 0.0
    %56 = vmatprep.subr.mxu0 0.0
    %57 = vmatpush1.msra.mxu0 0.0
    %58 = vmatprep.subr.mxu0 0.0
    %59 = vmatpush1.msra.mxu0 0.0
    %60 = vmatprep.subr.mxu0 0.0
    %61 = vmatpush1.msra.mxu0 0.0
    %62 = vmatprep.subr.mxu0 0.0
    %63 = vmatpush1.msra.mxu0 0.0
    %64 = vmatprep.subr.mxu0 0.0
    %65 = vmatpush1.msra.mxu0 0.0
    %66 = vmatprep.subr.mxu0 0.0
    %67 = vmatpush1.msra.mxu0 0.0
    %68 = vmatprep.subr.mxu0 0.0
    %69 = vmatpush1.msra.mxu0 0.0
    %70 = vmatprep.subr.mxu0 0.0
    %71 = vmatpush1.msra.mxu0 0.0
    %72 = vmatprep.subr.mxu0 0.0
    %73 = vmatpush1.msra.mxu0 0.0
    %74 = vmatprep.subr.mxu0 0.0
    %75 = vmatpush1.msra.mxu0 0.0
    %76 = vmatprep.subr.mxu0 0.0
    %77 = vmatpush1.msra.mxu0 %v40
    %78 = vmatprep.subr.mxu0 0.0
    %79 = vmatpush2.msra.mxu0 0.0
    %80 = vmatprep.subr.mxu0 0.0
    %81 = vmatpush2.msra.mxu0 0.0
    %82 = vmatprep.subr.mxu0 0.0
    %83 = vmatpush2.msra.mxu0 0.0
    %84 = vmatprep.subr.mxu0 0.0
    %85 = vmatpush2.msra.mxu0 0.0
    %86 = vmatprep.subr.mxu0 0.0
    %87 = vmatpush2.msra.mxu0 0.0
    %88 = vmatprep.subr.mxu0 0.0
    %89 = vmatpush2.msra.mxu0 0.0
    %90 = vmatprep.subr.mxu0 0.0
    %91 = vmatpush2.msra.mxu0 0.0
    %92 = vmatprep.subr.mxu0 0.0
    %93 = vmatpush2.msra.mxu0 0.0
    %94 = vmatprep.subr.mxu0 0.0
    %95 = vmatpush2.msra.mxu0 0.0
    %96 = vmatprep.subr.mxu0 0.0
    %97 = vmatpush2.msra.mxu0 0.0
    %98 = vmatprep.subr.mxu0 0.0
    %99 = vmatpush2.msra.mxu0 0.0
    %100 = vmatprep.subr.mxu0 0.0
    %101 = vmatpush2.msra.mxu0 0.0
    %102 = vmatprep.subr.mxu0 0.0
    %103 = vmatpush2.msra.mxu0 0.0
    %104 = vmatprep.subr.mxu0 0.0
    %105 = vmatpush2.msra.mxu0 0.0
    %106 = vmatprep.subr.mxu0 0.0
    %107 = vmatpush2.msra.mxu0 0.0
    %108 = vmatprep.subr.mxu0 0.0
    %109 = vmatpush2.msra.mxu0 0.0
    %110 = vmatprep.mubr.f32.mxu0 0.0
    %111 = vmatmul.mubr.f32.gmra.mxu0 %v44
    %v112 = vpop.f32.mrf.mxu0
    %v113 = vadd.f32 0.0, %v112
    %v114 = vpop.f32.mrf.mxu0
    %115 = vdwg.mxu0
    %v117 = vlaneseq
    %v118 = vshrl.u32 %v117, 7
    %v119 = vsub.s32 0, %v118
    %v120 = vrot.slane %v41, %v119
    %v122 = vsub.f32 %v113, %v120
    %v123 = vmul.f32 %v122, 0.5
    %v124 = vtanh.pop %v123
    %v125 = vadd.f32 %v124, 1.0
    %v126 = vmul.f32 %v125, 0.5
    %127 = vst [vmem:[#allocation7] sm:$0xff] %v126
    // Predicated region
    $region22: #{tpu_custom_call.1} parent=1 // pred_check
      _
    $region23: #{tpu_custom_call.1} parent=1 // pred_check_branch
      %129 = sbr.rel (0) target = $region25
    $region24: #{tpu_custom_call.1} parent=1 // pred_region
      %s131 = ssub.s32 128, 128
      %132 = vsyncadd [#allocation4], %s131
      %s134 = sshll.u32 [#allocation7], 4
      %s135 = int_to_ptr.vmem [resolvable:$true] %s134
      %137 = dma.vmem_to_hbm [thread:$0]  %s135, 128, %s3, [#allocation4]
    $region25: #{tpu_custom_call.1} parent=1 // pred_fallthru
      _
    // Predicated region
    $region26: #{tpu_custom_call.1} parent=1 // pred_check
      _
    $region27: #{tpu_custom_call.1} parent=1 // pred_check_branch
      %139 = sbr.rel (0) target = $region29
    $region28: #{tpu_custom_call.1} parent=1 // pred_region
      %140 = dma.done [#allocation4], 128
    $region29: #{tpu_custom_call.1} parent=1 // pred_fallthru
      _
    %141 = vsyncpa [#allocation3], 1
    %142 = vsyncpa [#allocation6], 1
    %143 = vsyncpa [#allocation4], 1

</llo_original>
